<compile_context>
chip_gen: v7x
topology: tpu7x:2x2x1
jax: 0.10.0
libtpu: 0.0.40
codegen_flags: <defaults>
</compile_context>

<pallas_src>
import functools

import jax
import jax.numpy as jnp
from jax.experimental import pallas as pl
from jax.experimental.pallas import tpu as pltpu

KH = KW = 3  # conv kernel size of the synthetic grasp/place encoders


# ----------------------------------------------------------------------------
# Fully fused kernel: both branches + merge MLP in one body (single grid step)
# ----------------------------------------------------------------------------
def _fused_forward_kernel(
    x_ref, wc_ref, bc_ref, sel_ref, wz_ref, bz_ref, wr_ref, br_ref,
    w1_ref, b1_ref, w2_ref, b2_ref,
    z_ref, r_ref, reward_ref,
    *, image_w, s_len,
):
    x = x_ref[...]                    # (CH, S_pad) f32: combined channels on sublanes,
                                      # flat (n,h,w) on lanes (zero-padded past S)

    # In-kernel "im2col": each 3x3 tap is a static lane-offset slice of x; one
    # slice covers BOTH branches (they share the sublane axis).  The patch
    # block lives only in VMEM.  Row order: tap-major, combined-channel-minor,
    # matching the flattened block-diagonal conv weights.
    taps = []
    for kh in range(KH):
        for kw in range(KW):
            s = kh * image_w + kw
            taps.append(x[:, s:s + s_len])
    patches = jnp.concatenate(taps, axis=0).astype(jnp.bfloat16)       # (9*CH, S)

    # Both branches' convs as ONE bf16 MXU matmul (block-diagonal weights),
    # f32 accumulation; bias/ReLU in f32.
    acc = jnp.dot(wc_ref[...], patches, preferred_element_type=jnp.float32)  # (OC_all, S)
    acc = jnp.maximum(acc + bc_ref[...], 0.0)

    # Masked global-average-pool: Sel[n, p] = 1/(OH*OW) on sample-n's valid
    # conv positions and 0 on positions whose 3x3 window straddles an image-row
    # or sample boundary (those lanes hold garbage conv values and must not
    # enter the mean).
    pooled = jax.lax.dot_general(
        sel_ref[...], acc,
        dimension_numbers=(((1,), (1,)), ((), ())),
        preferred_element_type=jnp.float32)                            # (N, OC_all)

    # Block-diagonal z / sigmoid-reward heads (f32): columns [:Z]=grasp, [Z:]=place.
    z_all = jnp.dot(pooled, wz_ref[...], preferred_element_type=jnp.float32) + bz_ref[...]
    r_all = jax.nn.sigmoid(
        jnp.dot(pooled, wr_ref[...], preferred_element_type=jnp.float32) + br_ref[...])
    z_ref[...] = z_all
    r_ref[...] = r_all

    # Merge MLP: z_all already equals concat([z_g, z_p], axis=1).
    h = jnp.maximum(
        jnp.dot(z_all, w1_ref[...], preferred_element_type=jnp.float32) + b1_ref[...], 0.0)
    reward_ref[...] = jax.nn.sigmoid(
        jnp.dot(h, w2_ref[...], preferred_element_type=jnp.float32) + b2_ref[...])


# ----------------------------------------------------------------------------
# Wrapper: exact semantics of Combined_model.forward, one fused pallas_call
# ----------------------------------------------------------------------------
def combined_model_forward(params, x1, x2, x3):
    N, C, H, W = x1.shape
    Cpad = 2 * C                                  # per-branch channel slots
    CH = 2 * Cpad                                 # combined channel slots (grasp | place)
    OH, OW = H - KH + 1, W - KW + 1
    S = N * H * W
    shift_max = (KH - 1) * W + (KW - 1)
    S_pad = ((S + shift_max + 127) // 128) * 128  # lane-dense, room for all tap shifts
    K = KH * KW * CH

    OCg = params["grasp"]["conv_w"].shape[0]
    OCp = params["place"]["conv_w"].shape[0]
    OC_all = OCg + OCp
    Z = params["grasp"]["wz"].shape[1]
    Hd = params["merge"]["w1"].shape[1]

    # --- combined input slab: (CH, S_pad), channels-on-sublanes layout --------
    def to_cs(x):                                 # (N, c, H, W) -> (c, N*H*W)
        return jnp.transpose(x, (1, 0, 2, 3)).reshape(x.shape[1], -1)

    xg = jnp.pad(to_cs(x1), ((0, Cpad - C), (0, 0)))            # grasp -> slots [0, Cpad)
    xp = to_cs(jnp.concatenate([x2, x3], axis=1))               # place -> slots [Cpad, CH)
    Xc = jnp.concatenate([xg, xp], axis=0)                      # (CH, S)
    Xc = jnp.pad(Xc, ((0, 0), (0, S_pad - S))).astype(jnp.float32)

    # --- block-diagonal conv weights flattened to (OC_all, K), bf16 for MXU ---
    def flat_w(w, ch_off):                        # (oc, ci, 3, 3) -> (oc, K)
        oc, ci = w.shape[0], w.shape[1]
        wfull = jnp.zeros((oc, CH, KH, KW), w.dtype).at[:, ch_off:ch_off + ci].set(w)
        return jnp.transpose(wfull, (0, 2, 3, 1)).reshape(oc, K)

    Wc = jnp.concatenate([flat_w(params["grasp"]["conv_w"], 0),
                          flat_w(params["place"]["conv_w"], Cpad)],
                         axis=0).astype(jnp.bfloat16)           # (OC_all, K)
    Bc = jnp.concatenate([params["grasp"]["conv_b"],
                          params["place"]["conv_b"]]).reshape(OC_all, 1).astype(jnp.float32)

    # --- masked-GAP selection matrix (shared by both branches) ---------------
    p_idx = jnp.arange(S)
    valid = ((p_idx % W) < OW) & (((p_idx // W) % H) < OH)
    samp = p_idx // (H * W)
    Sel = ((samp[None, :] == jnp.arange(N)[:, None]) & valid[None, :])
    Sel = Sel.astype(jnp.float32) / float(OH * OW)              # (N, S)

    # --- block-diagonal head weights + merge weights --------------------------
    Wz = (jnp.zeros((OC_all, 2 * Z), jnp.float32)
          .at[:OCg, :Z].set(params["grasp"]["wz"])
          .at[OCg:, Z:].set(params["place"]["wz"]))
    Bz = jnp.concatenate([params["grasp"]["bz"], params["place"]["bz"]]).reshape(1, 2 * Z)
    Wr = (jnp.zeros((OC_all, 2), jnp.float32)
          .at[:OCg, 0:1].set(params["grasp"]["wr"])
          .at[OCg:, 1:2].set(params["place"]["wr"]))
    Br = jnp.concatenate([params["grasp"]["br"], params["place"]["br"]]).reshape(1, 2)
    mp = params["merge"]
    W1, B1 = mp["w1"], mp["b1"].reshape(1, Hd)
    W2, B2 = mp["w2"], mp["b2"].reshape(1, 1)

    kernel = functools.partial(_fused_forward_kernel, image_w=W, s_len=S)
    z_all, r_all, reward = pl.pallas_call(
        kernel,
        out_shape=(
            jax.ShapeDtypeStruct((N, 2 * Z), jnp.float32),
            jax.ShapeDtypeStruct((N, 2), jnp.float32),
            jax.ShapeDtypeStruct((N, 1), jnp.float32),
        ),
        grid=(1,),
        in_specs=[
            pl.BlockSpec((CH, S_pad), lambda i: (0, 0)),        # Xc
            pl.BlockSpec((OC_all, K), lambda i: (0, 0)),        # Wc
            pl.BlockSpec((OC_all, 1), lambda i: (0, 0)),        # Bc
            pl.BlockSpec((N, S), lambda i: (0, 0)),             # Sel
            pl.BlockSpec((OC_all, 2 * Z), lambda i: (0, 0)),    # Wz
            pl.BlockSpec((1, 2 * Z), lambda i: (0, 0)),         # Bz
            pl.BlockSpec((OC_all, 2), lambda i: (0, 0)),        # Wr
            pl.BlockSpec((1, 2), lambda i: (0, 0)),             # Br
            pl.BlockSpec((2 * Z, Hd), lambda i: (0, 0)),        # W1
            pl.BlockSpec((1, Hd), lambda i: (0, 0)),            # B1
            pl.BlockSpec((Hd, 1), lambda i: (0, 0)),            # W2
            pl.BlockSpec((1, 1), lambda i: (0, 0)),             # B2
        ],
        out_specs=(
            pl.BlockSpec((N, 2 * Z), lambda i: (0, 0)),
            pl.BlockSpec((N, 2), lambda i: (0, 0)),
            pl.BlockSpec((N, 1), lambda i: (0, 0)),
        ),
        compiler_params=pltpu.CompilerParams(dimension_semantics=("arbitrary",)),
    )(Xc, Wc, Bc, Sel, Wz, Bz, Wr, Br, W1, B1, W2, B2)

    # These correspond to the (N, C) reshapes done in Combined_model.forward.
    z_g, z_p = z_all[:, :Z], z_all[:, Z:]
    reward_g, reward_p = r_all[:, 0:1], r_all[:, 1:2]
    return z_g, reward_g, z_p, reward_p, reward


# ----------------------------------------------------------------------------
# Deterministic parameter init (synthetic sub-models)
# ----------------------------------------------------------------------------
def _init_branch(key, in_ch, oc=16, zdim=8):
    k = jax.random.split(key, 6)
    fan_conv = in_ch * 3 * 3
    return {
        "conv_w": jax.random.normal(k[0], (oc, in_ch, 3, 3), jnp.float32) / jnp.sqrt(fan_conv),
        "conv_b": jax.random.normal(k[1], (oc,), jnp.float32) * 0.01,
        "wz": jax.random.normal(k[2], (oc, zdim), jnp.float32) / jnp.sqrt(oc),
        "bz": jax.random.normal(k[3], (zdim,), jnp.float32) * 0.01,
        "wr": jax.random.normal(k[4], (oc, 1), jnp.float32) / jnp.sqrt(oc),
        "br": jax.random.normal(k[5], (1,), jnp.float32) * 0.01,
    }


def init_params(key, in_ch=4, zdim=8, hidden=32):
    kg, kp, km = jax.random.split(key, 3)
    k = jax.random.split(km, 4)
    merge_in = 2 * zdim
    return {
        "grasp": _init_branch(kg, in_ch, zdim=zdim),
        "place": _init_branch(kp, 2 * in_ch, zdim=zdim),
        "merge": {
            "w1": jax.random.normal(k[0], (merge_in, hidden), jnp.float32) / jnp.sqrt(merge_in),
            "b1": jax.random.normal(k[1], (hidden,), jnp.float32) * 0.01,
            "w2": jax.random.normal(k[2], (hidden, 1), jnp.float32) / jnp.sqrt(hidden),
            "b2": jax.random.normal(k[3], (1,), jnp.float32) * 0.01,
        },
    }


# ----------------------------------------------------------------------------
# Pure-JAX reference (conv operands bf16-quantized to match the kernel's MXU)
# ----------------------------------------------------------------------------
def _ref_branch(p, x):
    xb = x.astype(jnp.bfloat16).astype(jnp.float32)
    wb = p["conv_w"].astype(jnp.bfloat16).astype(jnp.float32)
    h = jax.lax.conv_general_dilated(
        xb, wb, (1, 1), "VALID", dimension_numbers=("NCHW", "OIHW", "NCHW"))
    h = jnp.maximum(h + p["conv_b"][None, :, None, None], 0.0)
    feat = jnp.mean(h, axis=(2, 3))
    z = feat @ p["wz"] + p["bz"]
    r = jax.nn.sigmoid(feat @ p["wr"] + p["br"])
    return z, r


def ref_forward(params, x1, x2, x3):
    z_g, r_g = _ref_branch(params["grasp"], x1)
    z_p, r_p = _ref_branch(params["place"], jnp.concatenate([x2, x3], axis=1))
    mp = params["merge"]
    h = jnp.maximum(jnp.concatenate([z_g, z_p], axis=1) @ mp["w1"] + mp["b1"], 0.0)
    reward = jax.nn.sigmoid(h @ mp["w2"] + mp["b2"])
    return z_g, r_g, z_p, r_p, reward


# ----------------------------------------------------------------------------
if __name__ == "__main__":
    key = jax.random.PRNGKey(0)
    kx1, kx2, kx3, kp = jax.random.split(key, 4)

    N, C, H, W = 2, 4, 16, 16
    x1 = jax.random.normal(kx1, (N, C, H, W), jnp.float32)
    x2 = jax.random.normal(kx2, (N, C, H, W), jnp.float32)
    x3 = jax.random.normal(kx3, (N, C, H, W), jnp.float32)

    params = init_params(kp, in_ch=C, zdim=8, hidden=32)

    fwd = jax.jit(functools.partial(combined_model_forward, params))
    outs = jax.block_until_ready(fwd(x1, x2, x3))

    refs = ref_forward(params, x1, x2, x3)
    for o, r in zip(outs, refs):
        assert o.shape == r.shape, (o.shape, r.shape)
        assert jnp.allclose(o, r, atol=5e-4, rtol=5e-4), float(jnp.max(jnp.abs(o - r)))

    print("KERNEL_OK")
</pallas_src>

<mosaic_0001>
module attributes {stable_mosaic.version = 11 : i64} {
  func.func @_fused_forward_kernel(%arg0: i32, %arg1: memref<16x640xf32, #tpu.memory_space<vmem>>, %arg2: memref<32x144xbf16, #tpu.memory_space<vmem>>, %arg3: memref<32x1xf32, #tpu.memory_space<vmem>>, %arg4: memref<2x512xf32, #tpu.memory_space<vmem>>, %arg5: memref<32x16xf32, #tpu.memory_space<vmem>>, %arg6: memref<1x16xf32, #tpu.memory_space<vmem>>, %arg7: memref<32x2xf32, #tpu.memory_space<vmem>>, %arg8: memref<1x2xf32, #tpu.memory_space<vmem>>, %arg9: memref<16x32xf32, #tpu.memory_space<vmem>>, %arg10: memref<1x32xf32, #tpu.memory_space<vmem>>, %arg11: memref<32x1xf32, #tpu.memory_space<vmem>>, %arg12: memref<1x1xf32, #tpu.memory_space<vmem>>, %arg13: memref<2x16xf32, #tpu.memory_space<vmem>>, %arg14: memref<2x2xf32, #tpu.memory_space<vmem>>, %arg15: memref<2x1xf32, #tpu.memory_space<vmem>>) attributes {dimension_semantics = [#tpu.dimension_semantics<arbitrary>], iteration_bounds = array<i64: 1>, scalar_prefetch = 0 : i64, scratch_operands = 0 : i64, tpu.core_type = #tpu.core_type<tc>, window_params = [{pipeline_mode = #tpu.pipeline_mode<synchronous>, transform_indices = @transform_0, window_bounds = array<i64: 16, 640>}, {pipeline_mode = #tpu.pipeline_mode<synchronous>, transform_indices = @transform_1, window_bounds = array<i64: 32, 144>}, {pipeline_mode = #tpu.pipeline_mode<synchronous>, transform_indices = @transform_2, window_bounds = array<i64: 32, 1>}, {pipeline_mode = #tpu.pipeline_mode<synchronous>, transform_indices = @transform_3, window_bounds = array<i64: 2, 512>}, {pipeline_mode = #tpu.pipeline_mode<synchronous>, transform_indices = @transform_4, window_bounds = array<i64: 32, 16>}, {pipeline_mode = #tpu.pipeline_mode<synchronous>, transform_indices = @transform_5, window_bounds = array<i64: 1, 16>}, {pipeline_mode = #tpu.pipeline_mode<synchronous>, transform_indices = @transform_6, window_bounds = array<i64: 32, 2>}, {pipeline_mode = #tpu.pipeline_mode<synchronous>, transform_indices = @transform_7, window_bounds = array<i64: 1, 2>}, {pipeline_mode = #tpu.pipeline_mode<synchronous>, transform_indices = @transform_8, window_bounds = array<i64: 16, 32>}, {pipeline_mode = #tpu.pipeline_mode<synchronous>, transform_indices = @transform_9, window_bounds = array<i64: 1, 32>}, {pipeline_mode = #tpu.pipeline_mode<synchronous>, transform_indices = @transform_10, window_bounds = array<i64: 32, 1>}, {pipeline_mode = #tpu.pipeline_mode<synchronous>, transform_indices = @transform_11, window_bounds = array<i64: 1, 1>}, {pipeline_mode = #tpu.pipeline_mode<synchronous>, transform_indices = @transform_12, window_bounds = array<i64: 2, 16>}, {pipeline_mode = #tpu.pipeline_mode<synchronous>, transform_indices = @transform_13, window_bounds = array<i64: 2, 2>}, {pipeline_mode = #tpu.pipeline_mode<synchronous>, transform_indices = @transform_14, window_bounds = array<i64: 2, 1>}]} {
    %c0 = arith.constant 0 : index
    %c0_0 = arith.constant 0 : index
    %0 = vector.load %arg1[%c0, %c0_0] : memref<16x640xf32, #tpu.memory_space<vmem>>, vector<16x640xf32>
    %1 = vector.extract_strided_slice %0 {offsets = [0, 0], sizes = [16, 512], strides = [1, 1]} : vector<16x640xf32> to vector<16x512xf32>
    %2 = vector.extract_strided_slice %0 {offsets = [0, 1], sizes = [16, 512], strides = [1, 1]} : vector<16x640xf32> to vector<16x512xf32>
    %3 = vector.extract_strided_slice %0 {offsets = [0, 2], sizes = [16, 512], strides = [1, 1]} : vector<16x640xf32> to vector<16x512xf32>
    %4 = vector.extract_strided_slice %0 {offsets = [0, 16], sizes = [16, 512], strides = [1, 1]} : vector<16x640xf32> to vector<16x512xf32>
    %5 = vector.extract_strided_slice %0 {offsets = [0, 17], sizes = [16, 512], strides = [1, 1]} : vector<16x640xf32> to vector<16x512xf32>
    %6 = vector.extract_strided_slice %0 {offsets = [0, 18], sizes = [16, 512], strides = [1, 1]} : vector<16x640xf32> to vector<16x512xf32>
    %7 = vector.extract_strided_slice %0 {offsets = [0, 32], sizes = [16, 512], strides = [1, 1]} : vector<16x640xf32> to vector<16x512xf32>
    %8 = vector.extract_strided_slice %0 {offsets = [0, 33], sizes = [16, 512], strides = [1, 1]} : vector<16x640xf32> to vector<16x512xf32>
    %9 = vector.extract_strided_slice %0 {offsets = [0, 34], sizes = [16, 512], strides = [1, 1]} : vector<16x640xf32> to vector<16x512xf32>
    %10 = tpu.concatenate %1, %2, %3, %4, %5, %6, %7, %8, %9 in 0 : vector<16x512xf32>, vector<16x512xf32>, vector<16x512xf32>, vector<16x512xf32>, vector<16x512xf32>, vector<16x512xf32>, vector<16x512xf32>, vector<16x512xf32>, vector<16x512xf32> -> vector<144x512xf32>
    %11 = arith.truncf %10 : vector<144x512xf32> to vector<144x512xbf16>
    %c0_1 = arith.constant 0 : index
    %c0_2 = arith.constant 0 : index
    %12 = vector.load %arg2[%c0_1, %c0_2] : memref<32x144xbf16, #tpu.memory_space<vmem>>, vector<32x144xbf16>
    %cst = arith.constant dense<0.000000e+00> : vector<32x512xf32>
    %13 = tpu.matmul %12, %11, %cst {dimension_numbers = #tpu.dot_dimension_numbers<[1], [0], [0], [1], [0, 0, 1, 1], [], []>} : vector<32x144xbf16>, vector<144x512xbf16>, vector<32x512xf32> -> vector<32x512xf32>
    %c0_3 = arith.constant 0 : index
    %c0_4 = arith.constant 0 : index
    %14 = vector.load %arg3[%c0_3, %c0_4] : memref<32x1xf32, #tpu.memory_space<vmem>>, vector<32x1xf32>
    %15 = vector.broadcast %14 : vector<32x1xf32> to vector<32x512xf32>
    %16 = arith.addf %13, %15 : vector<32x512xf32>
    %cst_5 = arith.constant 0.000000e+00 : f32
    %17 = vector.broadcast %cst_5 : f32 to vector<32x512xf32>
    %18 = arith.maximumf %16, %17 : vector<32x512xf32>
    %c0_6 = arith.constant 0 : index
    %c0_7 = arith.constant 0 : index
    %19 = vector.load %arg4[%c0_6, %c0_7] : memref<2x512xf32, #tpu.memory_space<vmem>>, vector<2x512xf32>
    %cst_8 = arith.constant dense<0.000000e+00> : vector<2x32xf32>
    %20 = tpu.matmul %19, %18, %cst_8 {dimension_numbers = #tpu.dot_dimension_numbers<[1], [1], [0], [0], [0, 0, 1, 0], [], []>} : vector<2x512xf32>, vector<32x512xf32>, vector<2x32xf32> -> vector<2x32xf32>
    %c0_9 = arith.constant 0 : index
    %c0_10 = arith.constant 0 : index
    %21 = vector.load %arg5[%c0_9, %c0_10] : memref<32x16xf32, #tpu.memory_space<vmem>>, vector<32x16xf32>
    %cst_11 = arith.constant dense<0.000000e+00> : vector<2x16xf32>
    %22 = tpu.matmul %20, %21, %cst_11 {dimension_numbers = #tpu.dot_dimension_numbers<[1], [0], [0], [1], [0, 0, 1, 1], [], []>} : vector<2x32xf32>, vector<32x16xf32>, vector<2x16xf32> -> vector<2x16xf32>
    %c0_12 = arith.constant 0 : index
    %c0_13 = arith.constant 0 : index
    %23 = vector.load %arg6[%c0_12, %c0_13] : memref<1x16xf32, #tpu.memory_space<vmem>>, vector<1x16xf32>
    %24 = vector.broadcast %23 : vector<1x16xf32> to vector<2x16xf32>
    %25 = arith.addf %22, %24 : vector<2x16xf32>
    %c0_14 = arith.constant 0 : index
    %c0_15 = arith.constant 0 : index
    %26 = vector.load %arg7[%c0_14, %c0_15] : memref<32x2xf32, #tpu.memory_space<vmem>>, vector<32x2xf32>
    %cst_16 = arith.constant dense<0.000000e+00> : vector<2x2xf32>
    %27 = tpu.matmul %20, %26, %cst_16 {dimension_numbers = #tpu.dot_dimension_numbers<[1], [0], [0], [1], [0, 0, 1, 1], [], []>} : vector<2x32xf32>, vector<32x2xf32>, vector<2x2xf32> -> vector<2x2xf32>
    %c0_17 = arith.constant 0 : index
    %c0_18 = arith.constant 0 : index
    %28 = vector.load %arg8[%c0_17, %c0_18] : memref<1x2xf32, #tpu.memory_space<vmem>>, vector<1x2xf32>
    %29 = vector.broadcast %28 : vector<1x2xf32> to vector<2x2xf32>
    %30 = arith.addf %27, %29 : vector<2x2xf32>
    %31 = arith.negf %30 : vector<2x2xf32>
    %32 = math.exp %31 : vector<2x2xf32>
    %cst_19 = arith.constant 1.000000e+00 : f32
    %33 = vector.broadcast %cst_19 : f32 to vector<2x2xf32>
    %34 = arith.addf %33, %32 : vector<2x2xf32>
    %35 = arith.divf %33, %34 : vector<2x2xf32>
    %c0_20 = arith.constant 0 : index
    %c0_21 = arith.constant 0 : index
    %36 = vector.load %arg13[%c0_20, %c0_21] : memref<2x16xf32, #tpu.memory_space<vmem>>, vector<2x16xf32>
    tpu.vector_store %arg13[%c0_20, %c0_21], %25 {strides = array<i32>} : memref<2x16xf32, #tpu.memory_space<vmem>>, vector<2x16xf32>,
    %c0_22 = arith.constant 0 : index
    %c0_23 = arith.constant 0 : index
    %37 = vector.load %arg14[%c0_22, %c0_23] : memref<2x2xf32, #tpu.memory_space<vmem>>, vector<2x2xf32>
    tpu.vector_store %arg14[%c0_22, %c0_23], %35 {strides = array<i32>} : memref<2x2xf32, #tpu.memory_space<vmem>>, vector<2x2xf32>,
    %c0_24 = arith.constant 0 : index
    %c0_25 = arith.constant 0 : index
    %38 = vector.load %arg9[%c0_24, %c0_25] : memref<16x32xf32, #tpu.memory_space<vmem>>, vector<16x32xf32>
    %cst_26 = arith.constant dense<0.000000e+00> : vector<2x32xf32>
    %39 = tpu.matmul %25, %38, %cst_26 {dimension_numbers = #tpu.dot_dimension_numbers<[1], [0], [0], [1], [0, 0, 1, 1], [], []>} : vector<2x16xf32>, vector<16x32xf32>, vector<2x32xf32> -> vector<2x32xf32>
    %c0_27 = arith.constant 0 : index
    %c0_28 = arith.constant 0 : index
    %40 = vector.load %arg10[%c0_27, %c0_28] : memref<1x32xf32, #tpu.memory_space<vmem>>, vector<1x32xf32>
    %41 = vector.broadcast %40 : vector<1x32xf32> to vector<2x32xf32>
    %42 = arith.addf %39, %41 : vector<2x32xf32>
    %cst_29 = arith.constant 0.000000e+00 : f32
    %43 = vector.broadcast %cst_29 : f32 to vector<2x32xf32>
    %44 = arith.maximumf %42, %43 : vector<2x32xf32>
    %c0_30 = arith.constant 0 : index
    %c0_31 = arith.constant 0 : index
    %45 = vector.load %arg11[%c0_30, %c0_31] : memref<32x1xf32, #tpu.memory_space<vmem>>, vector<32x1xf32>
    %cst_32 = arith.constant dense<0.000000e+00> : vector<2x1xf32>
    %46 = tpu.matmul %44, %45, %cst_32 {dimension_numbers = #tpu.dot_dimension_numbers<[1], [0], [0], [1], [0, 0, 1, 1], [], []>} : vector<2x32xf32>, vector<32x1xf32>, vector<2x1xf32> -> vector<2x1xf32>
    %c0_33 = arith.constant 0 : index
    %c0_34 = arith.constant 0 : index
    %47 = vector.load %arg12[%c0_33, %c0_34] : memref<1x1xf32, #tpu.memory_space<vmem>>, vector<1x1xf32>
    %48 = vector.broadcast %47 : vector<1x1xf32> to vector<2x1xf32>
    %49 = arith.addf %46, %48 : vector<2x1xf32>
    %50 = arith.negf %49 : vector<2x1xf32>
    %51 = math.exp %50 : vector<2x1xf32>
    %cst_35 = arith.constant 1.000000e+00 : f32
    %52 = vector.broadcast %cst_35 : f32 to vector<2x1xf32>
    %53 = arith.addf %52, %51 : vector<2x1xf32>
    %54 = arith.divf %52, %53 : vector<2x1xf32>
    %c0_36 = arith.constant 0 : index
    %c0_37 = arith.constant 0 : index
    %55 = vector.load %arg15[%c0_36, %c0_37] : memref<2x1xf32, #tpu.memory_space<vmem>>, vector<2x1xf32>
    tpu.vector_store %arg15[%c0_36, %c0_37], %54 {strides = array<i32>} : memref<2x1xf32, #tpu.memory_space<vmem>>, vector<2x1xf32>,
    return
  }
  func.func @transform_0(%arg0: i32) -> (i32, i32) {
    %c0_i32 = arith.constant 0 : i32
    %c0_i32_0 = arith.constant 0 : i32
    %c0_i32_1 = arith.constant 0 : i32
    return %c0_i32, %c0_i32_0 : i32, i32
  }
  func.func @transform_1(%arg0: i32) -> (i32, i32) {
    %c0_i32 = arith.constant 0 : i32
    %c0_i32_0 = arith.constant 0 : i32
    %c0_i32_1 = arith.constant 0 : i32
    return %c0_i32, %c0_i32_0 : i32, i32
  }
  func.func @transform_2(%arg0: i32) -> (i32, i32) {
    %c0_i32 = arith.constant 0 : i32
    %c0_i32_0 = arith.constant 0 : i32
    %c0_i32_1 = arith.constant 0 : i32
    return %c0_i32, %c0_i32_0 : i32, i32
  }
  func.func @transform_3(%arg0: i32) -> (i32, i32) {
    %c0_i32 = arith.constant 0 : i32
    %c0_i32_0 = arith.constant 0 : i32
    %c0_i32_1 = arith.constant 0 : i32
    return %c0_i32, %c0_i32_0 : i32, i32
  }
  func.func @transform_4(%arg0: i32) -> (i32, i32) {
    %c0_i32 = arith.constant 0 : i32
    %c0_i32_0 = arith.constant 0 : i32
    %c0_i32_1 = arith.constant 0 : i32
    return %c0_i32, %c0_i32_0 : i32, i32
  }
  func.func @transform_5(%arg0: i32) -> (i32, i32) {
    %c0_i32 = arith.constant 0 : i32
    %c0_i32_0 = arith.constant 0 : i32
    %c0_i32_1 = arith.constant 0 : i32
    return %c0_i32, %c0_i32_0 : i32, i32
  }
  func.func @transform_6(%arg0: i32) -> (i32, i32) {
    %c0_i32 = arith.constant 0 : i32
    %c0_i32_0 = arith.constant 0 : i32
    %c0_i32_1 = arith.constant 0 : i32
    return %c0_i32, %c0_i32_0 : i32, i32
  }
  func.func @transform_7(%arg0: i32) -> (i32, i32) {
    %c0_i32 = arith.constant 0 : i32
    %c0_i32_0 = arith.constant 0 : i32
    %c0_i32_1 = arith.constant 0 : i32
    return %c0_i32, %c0_i32_0 : i32, i32
  }
  func.func @transform_8(%arg0: i32) -> (i32, i32) {
    %c0_i32 = arith.constant 0 : i32
    %c0_i32_0 = arith.constant 0 : i32
    %c0_i32_1 = arith.constant 0 : i32
    return %c0_i32, %c0_i32_0 : i32, i32
  }
  func.func @transform_9(%arg0: i32) -> (i32, i32) {
    %c0_i32 = arith.constant 0 : i32
    %c0_i32_0 = arith.constant 0 : i32
    %c0_i32_1 = arith.constant 0 : i32
    return %c0_i32, %c0_i32_0 : i32, i32
  }
  func.func @transform_10(%arg0: i32) -> (i32, i32) {
    %c0_i32 = arith.constant 0 : i32
    %c0_i32_0 = arith.constant 0 : i32
    %c0_i32_1 = arith.constant 0 : i32
    return %c0_i32, %c0_i32_0 : i32, i32
  }
  func.func @transform_11(%arg0: i32) -> (i32, i32) {
    %c0_i32 = arith.constant 0 : i32
    %c0_i32_0 = arith.constant 0 : i32
    %c0_i32_1 = arith.constant 0 : i32
    return %c0_i32, %c0_i32_0 : i32, i32
  }
  func.func @transform_12(%arg0: i32) -> (i32, i32) {
    %c0_i32 = arith.constant 0 : i32
    %c0_i32_0 = arith.constant 0 : i32
    %c0_i32_1 = arith.constant 0 : i32
    return %c0_i32, %c0_i32_0 : i32, i32
  }
  func.func @transform_13(%arg0: i32) -> (i32, i32) {
    %c0_i32 = arith.constant 0 : i32
    %c0_i32_0 = arith.constant 0 : i32
    %c0_i32_1 = arith.constant 0 : i32
    return %c0_i32, %c0_i32_0 : i32, i32
  }
  func.func @transform_14(%arg0: i32) -> (i32, i32) {
    %c0_i32 = arith.constant 0 : i32
    %c0_i32_0 = arith.constant 0 : i32
    %c0_i32_1 = arith.constant 0 : i32
    return %c0_i32, %c0_i32_0 : i32, i32
  }
}

</mosaic_0001>

<llo_original>
// kernel: combined_model_forward.1
$region0: #{combined_model_forward.1}
  #allocation0 [shape = 'u32[]', space=smem, size = 0x4, offset = 0x4, fixed_abs, tag = 'smem constant byte address 0x4 - core index']
  #allocation1 [shape = 'u32[144,128]{1,0:T(1,128)}', space=vmem, size = 0x12000, scoped, tag = 'internal scratch']
  #allocation2 [shape = 'f32[1,1]{1,0:T(1,128)S(1)}', space=vmem, size = 0x200, scoped, tag = 'scoped memory for combined_model_forward.1']
  %s0 = inlined_call_operand.vmem [shape: f32[16,640], index: 0, kind: input, shape index: {}]
  %s1 = inlined_call_operand.vmem [shape: bf16[32,144], index: 1, kind: input, shape index: {}]
  %s2 = inlined_call_operand.vmem [shape: f32[32,1], index: 2, kind: input, shape index: {}]
  %s3 = inlined_call_operand.vmem [shape: f32[2,512], index: 3, kind: input, shape index: {}]
  %s4 = inlined_call_operand.vmem [shape: f32[32,16], index: 4, kind: input, shape index: {}]
  %s5 = inlined_call_operand.vmem [shape: f32[1,16], index: 5, kind: input, shape index: {}]
  %s6 = inlined_call_operand.vmem [shape: f32[32,2], index: 6, kind: input, shape index: {}]
  %s7 = inlined_call_operand.vmem [shape: f32[1,2], index: 7, kind: input, shape index: {}]
  %s8 = inlined_call_operand.vmem [shape: f32[16,32], index: 8, kind: input, shape index: {}]
  %s9 = inlined_call_operand.vmem [shape: f32[1,32], index: 9, kind: input, shape index: {}]
  %s10 = inlined_call_operand.vmem [shape: f32[32,1], index: 10, kind: input, shape index: {}]
  %s11 = inlined_call_operand.<no memory space> [shape: f32[1,1], index: 11, kind: input, shape index: {}]
  %s12 = inlined_call_operand.vmem [shape: f32[2,16], index: 12, kind: output, shape index: {0}]
  %s13 = inlined_call_operand.vmem [shape: f32[2,2], index: 13, kind: output, shape index: {1}]
  %s14 = inlined_call_operand.vmem [shape: f32[2,1], index: 14, kind: output, shape index: {2}]
  %15 = xla_tuple %s12, %s13, %s14
  %s16 = sld [smem:[#allocation0]]
  $region74: #{combined_model_forward.1} parent=0
    _
  %s18 = ssub.s32 1, %s16
  %s19 = scalar_select 0, %s18, %s16
  %v20 = vstv %s11
  %21 = vst [vmem:[#allocation2] sm:$0x1] %v20
  // Predicated region
  $region2: #{combined_model_forward.1} parent=0 // pred_check
    _
  $region3: #{combined_model_forward.1} parent=0 // pred_check_branch
    %23 = sbr.rel (0) target = $region5
  $region4: #{combined_model_forward.1} parent=0 // pred_region
    _
  $region5: #{combined_model_forward.1} parent=0 // pred_fallthru
    _
  // Predicated region
  $region6: #{combined_model_forward.1} parent=0 // pred_check
    _
  $region7: #{combined_model_forward.1} parent=0 // pred_check_branch
    %25 = sbr.rel (0) target = $region9
  $region8: #{combined_model_forward.1} parent=0 // pred_region
    _
  $region9: #{combined_model_forward.1} parent=0 // pred_fallthru
    _
  // Predicated region
  $region10: #{combined_model_forward.1} parent=0 // pred_check
    _
  $region11: #{combined_model_forward.1} parent=0 // pred_check_branch
    %27 = sbr.rel (0) target = $region13
  $region12: #{combined_model_forward.1} parent=0 // pred_region
    _
  $region13: #{combined_model_forward.1} parent=0 // pred_fallthru
    _
  // Predicated region
  $region14: #{combined_model_forward.1} parent=0 // pred_check
    _
  $region15: #{combined_model_forward.1} parent=0 // pred_check_branch
    %29 = sbr.rel (0) target = $region17
  $region16: #{combined_model_forward.1} parent=0 // pred_region
    _
  $region17: #{combined_model_forward.1} parent=0 // pred_fallthru
    _
  // Predicated region
  $region18: #{combined_model_forward.1} parent=0 // pred_check
    _
  $region19: #{combined_model_forward.1} parent=0 // pred_check_branch
    %31 = sbr.rel (0) target = $region21
  $region20: #{combined_model_forward.1} parent=0 // pred_region
    _
  $region21: #{combined_model_forward.1} parent=0 // pred_fallthru
    _
  // Predicated region
  $region22: #{combined_model_forward.1} parent=0 // pred_check
    _
  $region23: #{combined_model_forward.1} parent=0 // pred_check_branch
    %33 = sbr.rel (0) target = $region25
  $region24: #{combined_model_forward.1} parent=0 // pred_region
    _
  $region25: #{combined_model_forward.1} parent=0 // pred_fallthru
    _
  // Predicated region
  $region26: #{combined_model_forward.1} parent=0 // pred_check
    _
  $region27: #{combined_model_forward.1} parent=0 // pred_check_branch
    %35 = sbr.rel (0) target = $region29
  $region28: #{combined_model_forward.1} parent=0 // pred_region
    _
  $region29: #{combined_model_forward.1} parent=0 // pred_fallthru
    _
  // Predicated region
  $region30: #{combined_model_forward.1} parent=0 // pred_check
    _
  $region31: #{combined_model_forward.1} parent=0 // pred_check_branch
    %37 = sbr.rel (0) target = $region33
  $region32: #{combined_model_forward.1} parent=0 // pred_region
    _
  $region33: #{combined_model_forward.1} parent=0 // pred_fallthru
    _
  // Predicated region
  $region34: #{combined_model_forward.1} parent=0 // pred_check
    _
  $region35: #{combined_model_forward.1} parent=0 // pred_check_branch
    %39 = sbr.rel (0) target = $region37
  $region36: #{combined_model_forward.1} parent=0 // pred_region
    _
  $region37: #{combined_model_forward.1} parent=0 // pred_fallthru
    _
  // Predicated region
  $region38: #{combined_model_forward.1} parent=0 // pred_check
    _
  $region39: #{combined_model_forward.1} parent=0 // pred_check_branch
    %41 = sbr.rel (0) target = $region41
  $region40: #{combined_model_forward.1} parent=0 // pred_region
    _
  $region41: #{combined_model_forward.1} parent=0 // pred_fallthru
    _
  // Predicated region
  $region42: #{combined_model_forward.1} parent=0 // pred_check
    _
  $region43: #{combined_model_forward.1} parent=0 // pred_check_branch
    %43 = sbr.rel (0) target = $region45
  $region44: #{combined_model_forward.1} parent=0 // pred_region
    _
  $region45: #{combined_model_forward.1} parent=0 // pred_fallthru
    _
  // Predicated region
  $region46: #{combined_model_forward.1} parent=0 // pred_check
    _
  $region47: #{combined_model_forward.1} parent=0 // pred_check_branch
    %45 = sbr.rel (0) target = $region49
  $region48: #{combined_model_forward.1} parent=0 // pred_region
    _
  $region49: #{combined_model_forward.1} parent=0 // pred_fallthru
    _
  %v47 = vld [vmem:[%s0] sm:$0xff]
  %v48 = vld [vmem:[%s0 + $0x8] sm:$0xff]
  %v49 = vld [vmem:[%s0 + $0x10] sm:$0xff]
  %v50 = vld [vmem:[%s0 + $0x18] sm:$0xff]
  %v51 = vld [vmem:[%s0 + $0x20] sm:$0xff]
  %v52 = vld [vmem:[%s0 + $0x28] sm:$0xff]
  %v53 = vld [vmem:[%s0 + $0x30] sm:$0xff]
  %v54 = vld [vmem:[%s0 + $0x38] sm:$0xff]
  %v55 = vld [vmem:[%s0 + $0x40] sm:$0xff]
  %v56 = vld [vmem:[%s0 + $0x48] sm:$0xff]
  %67 = vrot.lane.b32.xlu0 %v47, 127
  %v68 = vpop.permute.xlu0 %67
  %69 = vrot.lane.b32.xlu0 %v48, 127
  %v70 = vpop.permute.xlu0 %69
  %71 = vrot.lane.b32.xlu0 %v49, 127
  %v72 = vpop.permute.xlu0 %71
  %73 = vrot.lane.b32.xlu0 %v50, 127
  %v74 = vpop.permute.xlu0 %73
  %75 = vrot.lane.b32.xlu0 %v51, 127
  %v76 = vpop.permute.xlu0 %75
  %77 = vrot.lane.b32.xlu0 %v52, 127
  %v78 = vpop.permute.xlu0 %77
  %79 = vrot.lane.b32.xlu0 %v53, 127
  %v80 = vpop.permute.xlu0 %79
  %81 = vrot.lane.b32.xlu0 %v54, 127
  %v82 = vpop.permute.xlu0 %81
  %83 = vrot.lane.b32.xlu0 %v55, 127
  %v84 = vpop.permute.xlu0 %83
  %85 = vrot.lane.b32.xlu0 %v56, 127
  %v86 = vpop.permute.xlu0 %85
  %vm87 = vcmask 1039360
  %v88 = vsel %vm87, %v68, %v70
  %v89 = vsel %vm87, %v70, %v72
  %v90 = vsel %vm87, %v72, %v74
  %v91 = vsel %vm87, %v74, %v76
  %v92 = vsel %vm87, %v78, %v80
  %v93 = vsel %vm87, %v80, %v82
  %v94 = vsel %vm87, %v82, %v84
  %v95 = vsel %vm87, %v84, %v86
  %104 = vrot.lane.b32.xlu0 %v47, 126
  %v105 = vpop.permute.xlu0 %104
  %106 = vrot.lane.b32.xlu0 %v48, 126
  %v107 = vpop.permute.xlu0 %106
  %108 = vrot.lane.b32.xlu0 %v49, 126
  %v109 = vpop.permute.xlu0 %108
  %110 = vrot.lane.b32.xlu0 %v50, 126
  %v111 = vpop.permute.xlu0 %110
  %112 = vrot.lane.b32.xlu0 %v51, 126
  %v113 = vpop.permute.xlu0 %112
  %114 = vrot.lane.b32.xlu0 %v52, 126
  %v115 = vpop.permute.xlu0 %114
  %116 = vrot.lane.b32.xlu0 %v53, 126
  %v117 = vpop.permute.xlu0 %116
  %118 = vrot.lane.b32.xlu0 %v54, 126
  %v119 = vpop.permute.xlu0 %118
  %120 = vrot.lane.b32.xlu0 %v55, 126
  %v121 = vpop.permute.xlu0 %120
  %122 = vrot.lane.b32.xlu0 %v56, 126
  %v123 = vpop.permute.xlu0 %122
  %vm124 = vcmask 1031168
  %v125 = vsel %vm124, %v105, %v107
  %v126 = vsel %vm124, %v107, %v109
  %v127 = vsel %vm124, %v109, %v111
  %v128 = vsel %vm124, %v111, %v113
  %v129 = vsel %vm124, %v115, %v117
  %v130 = vsel %vm124, %v117, %v119
  %v131 = vsel %vm124, %v119, %v121
  %v132 = vsel %vm124, %v121, %v123
  %141 = vrot.lane.b32.xlu0 %v47, 112
  %v142 = vpop.permute.xlu0 %141
  %143 = vrot.lane.b32.xlu0 %v48, 112
  %v144 = vpop.permute.xlu0 %143
  %145 = vrot.lane.b32.xlu0 %v49, 112
  %v146 = vpop.permute.xlu0 %145
  %147 = vrot.lane.b32.xlu0 %v50, 112
  %v148 = vpop.permute.xlu0 %147
  %149 = vrot.lane.b32.xlu0 %v51, 112
  %v150 = vpop.permute.xlu0 %149
  %151 = vrot.lane.b32.xlu0 %v52, 112
  %v152 = vpop.permute.xlu0 %151
  %153 = vrot.lane.b32.xlu0 %v53, 112
  %v154 = vpop.permute.xlu0 %153
  %155 = vrot.lane.b32.xlu0 %v54, 112
  %v156 = vpop.permute.xlu0 %155
  %157 = vrot.lane.b32.xlu0 %v55, 112
  %v158 = vpop.permute.xlu0 %157
  %159 = vrot.lane.b32.xlu0 %v56, 112
  %v160 = vpop.permute.xlu0 %159
  %vm161 = vcmask 916480
  %v162 = vsel %vm161, %v142, %v144
  %v163 = vsel %vm161, %v144, %v146
  %v164 = vsel %vm161, %v146, %v148
  %v165 = vsel %vm161, %v148, %v150
  %v166 = vsel %vm161, %v152, %v154
  %v167 = vsel %vm161, %v154, %v156
  %v168 = vsel %vm161, %v156, %v158
  %v169 = vsel %vm161, %v158, %v160
  %178 = vrot.lane.b32.xlu0 %v47, 111
  %v179 = vpop.permute.xlu0 %178
  %180 = vrot.lane.b32.xlu0 %v48, 111
  %v181 = vpop.permute.xlu0 %180
  %182 = vrot.lane.b32.xlu0 %v49, 111
  %v183 = vpop.permute.xlu0 %182
  %184 = vrot.lane.b32.xlu0 %v50, 111
  %v185 = vpop.permute.xlu0 %184
  %186 = vrot.lane.b32.xlu0 %v51, 111
  %v187 = vpop.permute.xlu0 %186
  %188 = vrot.lane.b32.xlu0 %v52, 111
  %v189 = vpop.permute.xlu0 %188
  %190 = vrot.lane.b32.xlu0 %v53, 111
  %v191 = vpop.permute.xlu0 %190
  %192 = vrot.lane.b32.xlu0 %v54, 111
  %v193 = vpop.permute.xlu0 %192
  %194 = vrot.lane.b32.xlu0 %v55, 111
  %v195 = vpop.permute.xlu0 %194
  %196 = vrot.lane.b32.xlu0 %v56, 111
  %v197 = vpop.permute.xlu0 %196
  %vm198 = vcmask 908288
  %v199 = vsel %vm198, %v179, %v181
  %v200 = vsel %vm198, %v181, %v183
  %v201 = vsel %vm198, %v183, %v185
  %v202 = vsel %vm198, %v185, %v187
  %v203 = vsel %vm198, %v189, %v191
  %v204 = vsel %vm198, %v191, %v193
  %v205 = vsel %vm198, %v193, %v195
  %v206 = vsel %vm198, %v195, %v197
  %215 = vrot.lane.b32.xlu0 %v47, 110
  %v216 = vpop.permute.xlu0 %215
  %217 = vrot.lane.b32.xlu0 %v48, 110
  %v218 = vpop.permute.xlu0 %217
  %219 = vrot.lane.b32.xlu0 %v49, 110
  %v220 = vpop.permute.xlu0 %219
  %221 = vrot.lane.b32.xlu0 %v50, 110
  %v222 = vpop.permute.xlu0 %221
  %223 = vrot.lane.b32.xlu0 %v51, 110
  %v224 = vpop.permute.xlu0 %223
  %225 = vrot.lane.b32.xlu0 %v52, 110
  %v226 = vpop.permute.xlu0 %225
  %227 = vrot.lane.b32.xlu0 %v53, 110
  %v228 = vpop.permute.xlu0 %227
  %229 = vrot.lane.b32.xlu0 %v54, 110
  %v230 = vpop.permute.xlu0 %229
  %231 = vrot.lane.b32.xlu0 %v55, 110
  %v232 = vpop.permute.xlu0 %231
  %233 = vrot.lane.b32.xlu0 %v56, 110
  %v234 = vpop.permute.xlu0 %233
  %vm235 = vcmask 900096
  %v236 = vsel %vm235, %v216, %v218
  %v237 = vsel %vm235, %v218, %v220
  %v238 = vsel %vm235, %v220, %v222
  %v239 = vsel %vm235, %v222, %v224
  %v240 = vsel %vm235, %v226, %v228
  %v241 = vsel %vm235, %v228, %v230
  %v242 = vsel %vm235, %v230, %v232
  %v243 = vsel %vm235, %v232, %v234
  %252 = vrot.lane.b32.xlu0 %v47, 96
  %v253 = vpop.permute.xlu0 %252
  %254 = vrot.lane.b32.xlu0 %v48, 96
  %v255 = vpop.permute.xlu0 %254
  %256 = vrot.lane.b32.xlu0 %v49, 96
  %v257 = vpop.permute.xlu0 %256
  %258 = vrot.lane.b32.xlu0 %v50, 96
  %v259 = vpop.permute.xlu0 %258
  %260 = vrot.lane.b32.xlu0 %v51, 96
  %v261 = vpop.permute.xlu0 %260
  %262 = vrot.lane.b32.xlu0 %v52, 96
  %v263 = vpop.permute.xlu0 %262
  %264 = vrot.lane.b32.xlu0 %v53, 96
  %v265 = vpop.permute.xlu0 %264
  %266 = vrot.lane.b32.xlu0 %v54, 96
  %v267 = vpop.permute.xlu0 %266
  %268 = vrot.lane.b32.xlu0 %v55, 96
  %v269 = vpop.permute.xlu0 %268
  %270 = vrot.lane.b32.xlu0 %v56, 96
  %v271 = vpop.permute.xlu0 %270
  %vm272 = vcmask 785408
  %v273 = vsel %vm272, %v253, %v255
  %v274 = vsel %vm272, %v255, %v257
  %v275 = vsel %vm272, %v257, %v259
  %v276 = vsel %vm272, %v259, %v261
  %v277 = vsel %vm272, %v263, %v265
  %v278 = vsel %vm272, %v265, %v267
  %v279 = vsel %vm272, %v267, %v269
  %v280 = vsel %vm272, %v269, %v271
  %289 = vrot.lane.b32.xlu0 %v47, 95
  %v290 = vpop.permute.xlu0 %289
  %291 = vrot.lane.b32.xlu0 %v48, 95
  %v292 = vpop.permute.xlu0 %291
  %293 = vrot.lane.b32.xlu0 %v49, 95
  %v294 = vpop.permute.xlu0 %293
  %295 = vrot.lane.b32.xlu0 %v50, 95
  %v296 = vpop.permute.xlu0 %295
  %297 = vrot.lane.b32.xlu0 %v51, 95
  %v298 = vpop.permute.xlu0 %297
  %299 = vrot.lane.b32.xlu0 %v52, 95
  %v300 = vpop.permute.xlu0 %299
  %301 = vrot.lane.b32.xlu0 %v53, 95
  %v302 = vpop.permute.xlu0 %301
  %303 = vrot.lane.b32.xlu0 %v54, 95
  %v304 = vpop.permute.xlu0 %303
  %305 = vrot.lane.b32.xlu0 %v55, 95
  %v306 = vpop.permute.xlu0 %305
  %307 = vrot.lane.b32.xlu0 %v56, 95
  %v308 = vpop.permute.xlu0 %307
  %vm309 = vcmask 777216
  %v310 = vsel %vm309, %v290, %v292
  %v311 = vsel %vm309, %v292, %v294
  %v312 = vsel %vm309, %v294, %v296
  %v313 = vsel %vm309, %v296, %v298
  %v314 = vsel %vm309, %v300, %v302
  %v315 = vsel %vm309, %v302, %v304
  %v316 = vsel %vm309, %v304, %v306
  %v317 = vsel %vm309, %v306, %v308
  %326 = vrot.lane.b32.xlu0 %v47, 94
  %v327 = vpop.permute.xlu0 %326
  %328 = vrot.lane.b32.xlu0 %v48, 94
  %v329 = vpop.permute.xlu0 %328
  %330 = vrot.lane.b32.xlu0 %v49, 94
  %v331 = vpop.permute.xlu0 %330
  %332 = vrot.lane.b32.xlu0 %v50, 94
  %v333 = vpop.permute.xlu0 %332
  %334 = vrot.lane.b32.xlu0 %v51, 94
  %v335 = vpop.permute.xlu0 %334
  %336 = vrot.lane.b32.xlu0 %v52, 94
  %v337 = vpop.permute.xlu0 %336
  %338 = vrot.lane.b32.xlu0 %v53, 94
  %v339 = vpop.permute.xlu0 %338
  %340 = vrot.lane.b32.xlu0 %v54, 94
  %v341 = vpop.permute.xlu0 %340
  %342 = vrot.lane.b32.xlu0 %v55, 94
  %v343 = vpop.permute.xlu0 %342
  %344 = vrot.lane.b32.xlu0 %v56, 94
  %v345 = vpop.permute.xlu0 %344
  %vm346 = vcmask 769024
  %v347 = vsel %vm346, %v327, %v329
  %v348 = vsel %vm346, %v329, %v331
  %v349 = vsel %vm346, %v331, %v333
  %v350 = vsel %vm346, %v333, %v335
  %v351 = vsel %vm346, %v337, %v339
  %v352 = vsel %vm346, %v339, %v341
  %v353 = vsel %vm346, %v341, %v343
  %v354 = vsel %vm346, %v343, %v345
  %v363 = vpack.c.bf16 %v52, %v47
  %v364 = vpack.c.bf16 %v53, %v48
  %v365 = vpack.c.bf16 %v54, %v49
  %v366 = vpack.c.bf16 %v55, %v50
  %v367 = vpack.c.bf16 %v92, %v88
  %v368 = vpack.c.bf16 %v93, %v89
  %v369 = vpack.c.bf16 %v94, %v90
  %v370 = vpack.c.bf16 %v95, %v91
  %v371 = vpack.c.bf16 %v129, %v125
  %v372 = vpack.c.bf16 %v130, %v126
  %v373 = vpack.c.bf16 %v131, %v127
  %v374 = vpack.c.bf16 %v132, %v128
  %v375 = vpack.c.bf16 %v166, %v162
  %v376 = vpack.c.bf16 %v167, %v163
  %v377 = vpack.c.bf16 %v168, %v164
  %v378 = vpack.c.bf16 %v169, %v165
  %v379 = vpack.c.bf16 %v203, %v199
  %v380 = vpack.c.bf16 %v204, %v200
  %v381 = vpack.c.bf16 %v205, %v201
  %v382 = vpack.c.bf16 %v206, %v202
  %v383 = vpack.c.bf16 %v240, %v236
  %v384 = vpack.c.bf16 %v241, %v237
  %v385 = vpack.c.bf16 %v242, %v238
  %v386 = vpack.c.bf16 %v243, %v239
  %v387 = vpack.c.bf16 %v277, %v273
  %v388 = vpack.c.bf16 %v278, %v274
  %v389 = vpack.c.bf16 %v279, %v275
  %v390 = vpack.c.bf16 %v280, %v276
  %v391 = vpack.c.bf16 %v314, %v310
  %v392 = vpack.c.bf16 %v315, %v311
  %v393 = vpack.c.bf16 %v316, %v312
  %v394 = vpack.c.bf16 %v317, %v313
  %v395 = vpack.c.bf16 %v351, %v347
  %v396 = vpack.c.bf16 %v352, %v348
  %v397 = vpack.c.bf16 %v353, %v349
  %v398 = vpack.c.bf16 %v354, %v350
  %v399 = vld [vmem:[%s1] sm:$0xff]
  %v400 = vld [vmem:[%s1 + $0x8] sm:$0xff]
  %v401 = vld [vmem:[%s1 + $0x10] sm:$0xff]
  %v402 = vld [vmem:[%s1 + $0x18] sm:$0xff]
  %v403 = vld [vmem:[%s2] sm:$0xff]
  %v404 = vld [vmem:[%s2 + $0x8] sm:$0xff]
  %v405 = vld [vmem:[%s2 + $0x10] sm:$0xff]
  %v406 = vld [vmem:[%s2 + $0x18] sm:$0xff]
  %408 = vset.pattern.permute.xlu0 0
  %409 = vperm.xlu0 %408, %v403
  %v410 = vpop.permute.xlu0 %409
  %413 = vset.pattern.permute.xlu0 0
  %414 = vperm.xlu0 %413, %v404
  %v415 = vpop.permute.xlu0 %414
  %418 = vset.pattern.permute.xlu0 0
  %419 = vperm.xlu0 %418, %v405
  %v420 = vpop.permute.xlu0 %419
  %423 = vset.pattern.permute.xlu0 0
  %424 = vperm.xlu0 %423, %v406
  %v425 = vpop.permute.xlu0 %424
  %v431 = vunpack.c.l.b16 %v399
  %v432 = vunpack.c.h.b16 %v399
  %v433 = vunpack.c.l.b16 %v400
  %v434 = vunpack.c.h.b16 %v400
  %v435 = vunpack.c.l.b16 %v401
  %v436 = vunpack.c.h.b16 %v401
  %v437 = vunpack.c.l.b16 %v402
  %v438 = vunpack.c.h.b16 %v402
  %v439 = vpack.c.b16 %v433, %v431
  %v440 = vpack.c.b16 %v434, %v432
  %v441 = vpack.c.b16 %v437, %v435
  %v442 = vpack.c.b16 %v438, %v436
  %vm445 = vcmask 130048
  %v447 = vsel %vm445, %v440, 0
  %v450 = vsel %vm445, %v442, 0
  %452 = vmatprep.subr.bf16.mxu0 %v364
  %453 = vmatpush1.bf16.msra.mxu0 %v363
  %454 = vmatprep.subr.bf16.mxu0 %v368
  %455 = vmatpush1.bf16.msra.mxu0 %v367
  %456 = vmatprep.subr.bf16.mxu0 %v372
  %457 = vmatpush1.bf16.msra.mxu0 %v371
  %458 = vmatprep.subr.bf16.mxu0 %v376
  %459 = vmatpush1.bf16.msra.mxu0 %v375
  %460 = vmatprep.subr.bf16.mxu0 %v380
  %461 = vmatpush1.bf16.msra.mxu0 %v379
  %462 = vmatprep.subr.bf16.mxu0 %v384
  %463 = vmatpush1.bf16.msra.mxu0 %v383
  %464 = vmatprep.subr.bf16.mxu0 %v388
  %465 = vmatpush1.bf16.msra.mxu0 %v387
  %466 = vmatprep.subr.bf16.mxu0 %v392
  %467 = vmatpush1.bf16.msra.mxu0 %v391
  %468 = vmatprep.subr.bf16.mxu0 %v396
  %469 = vmatpush1.bf16.msra.mxu0 %v395
  %470 = vmatprep.subr.bf16.mxu0 0
  %471 = vmatpush1.bf16.msra.mxu0 0
  %472 = vmatprep.subr.bf16.mxu0 0
  %473 = vmatpush1.bf16.msra.mxu0 0
  %474 = vmatprep.subr.bf16.mxu0 0
  %475 = vmatpush1.bf16.msra.mxu0 0
  %476 = vmatprep.subr.bf16.mxu0 0
  %477 = vmatpush1.bf16.msra.mxu0 0
  %478 = vmatprep.subr.bf16.mxu0 0
  %479 = vmatpush1.bf16.msra.mxu0 0
  %480 = vmatprep.subr.bf16.mxu0 0
  %481 = vmatpush1.bf16.msra.mxu0 0
  %482 = vmatprep.subr.bf16.mxu0 0
  %483 = vmatpush1.bf16.msra.mxu0 0
  %484 = vmatprep.mubr.bf16.mxu0 %v447
  %485 = vmatmul.mubr.bf16.gmra.mrb[0].mxu0 %v439
  %v486 = vpop.f32.mrb[0].mxu0
  %v487 = vadd.f32 %v410, %v486
  %v488 = vpop.f32.mrb[0].mxu0
  %v489 = vadd.f32 %v410, %v488
  %v490 = vpop.f32.mrb[0].mxu0
  %v491 = vadd.f32 %v415, %v490
  %v492 = vpop.f32.mrb[0].mxu0
  %v493 = vadd.f32 %v415, %v492
  %494 = vmatprep.mubr.bf16.mxu0 %v450
  %495 = vmatmul.mubr.bf16.gmra.mrb[0].mxu0 %v441
  %v496 = vpop.f32.mrb[0].mxu0
  %v497 = vadd.f32 %v420, %v496
  %v498 = vpop.f32.mrb[0].mxu0
  %v499 = vadd.f32 %v420, %v498
  %v500 = vpop.f32.mrb[0].mxu0
  %v501 = vadd.f32 %v425, %v500
  %v502 = vpop.f32.mrb[0].mxu0
  %v503 = vadd.f32 %v425, %v502
  %504 = vdwg.mxu0
  %505 = vmatprep.subr.bf16.mxu0 %v366
  %506 = vmatpush1.bf16.msra.mxu0 %v365
  %507 = vmatprep.subr.bf16.mxu0 %v370
  %508 = vmatpush1.bf16.msra.mxu0 %v369
  %509 = vmatprep.subr.bf16.mxu0 %v374
  %510 = vmatpush1.bf16.msra.mxu0 %v373
  %511 = vmatprep.subr.bf16.mxu0 %v378
  %512 = vmatpush1.bf16.msra.mxu0 %v377
  %513 = vmatprep.subr.bf16.mxu0 %v382
  %514 = vmatpush1.bf16.msra.mxu0 %v381
  %515 = vmatprep.subr.bf16.mxu0 %v386
  %516 = vmatpush1.bf16.msra.mxu0 %v385
  %517 = vmatprep.subr.bf16.mxu0 %v390
  %518 = vmatpush1.bf16.msra.mxu0 %v389
  %519 = vmatprep.subr.bf16.mxu0 %v394
  %520 = vmatpush1.bf16.msra.mxu0 %v393
  %521 = vmatprep.subr.bf16.mxu0 %v398
  %522 = vmatpush1.bf16.msra.mxu0 %v397
  %523 = vmatprep.subr.bf16.mxu0 0
  %524 = vmatpush1.bf16.msra.mxu0 0
  %525 = vmatprep.subr.bf16.mxu0 0
  %526 = vmatpush1.bf16.msra.mxu0 0
  %527 = vmatprep.subr.bf16.mxu0 0
  %528 = vmatpush1.bf16.msra.mxu0 0
  %529 = vmatprep.subr.bf16.mxu0 0
  %530 = vmatpush1.bf16.msra.mxu0 0
  %531 = vmatprep.subr.bf16.mxu0 0
  %532 = vmatpush1.bf16.msra.mxu0 0
  %533 = vmatprep.subr.bf16.mxu0 0
  %534 = vmatpush1.bf16.msra.mxu0 0
  %535 = vmatprep.subr.bf16.mxu0 0
  %536 = vmatpush1.bf16.msra.mxu0 0
  %537 = vmatprep.mubr.bf16.mxu0 %v447
  %538 = vmatmul.mubr.bf16.gmra.mrb[0].mxu0 %v439
  %v539 = vpop.f32.mrb[0].mxu0
  %v540 = vadd.f32 %v410, %v539
  %v541 = vpop.f32.mrb[0].mxu0
  %v542 = vadd.f32 %v410, %v541
  %v543 = vpop.f32.mrb[0].mxu0
  %v544 = vadd.f32 %v415, %v543
  %v545 = vpop.f32.mrb[0].mxu0
  %v546 = vadd.f32 %v415, %v545
  %547 = vmatprep.mubr.bf16.mxu0 %v450
  %548 = vmatmul.mubr.bf16.gmra.mrb[0].mxu0 %v441
  %v549 = vpop.f32.mrb[0].mxu0
  %v550 = vadd.f32 %v420, %v549
  %v551 = vpop.f32.mrb[0].mxu0
  %v552 = vadd.f32 %v420, %v551
  %v553 = vpop.f32.mrb[0].mxu0
  %v554 = vadd.f32 %v425, %v553
  %v555 = vpop.f32.mrb[0].mxu0
  %v556 = vadd.f32 %v425, %v555
  %557 = vdwg.mxu0
  %v558 = vmax.f32 %v487, 0.0
  %v559 = vmax.f32 %v489, 0.0
  %v560 = vmax.f32 %v540, 0.0
  %v561 = vmax.f32 %v542, 0.0
  %v562 = vmax.f32 %v491, 0.0
  %v563 = vmax.f32 %v493, 0.0
  %v564 = vmax.f32 %v544, 0.0
  %v565 = vmax.f32 %v546, 0.0
  %v566 = vmax.f32 %v497, 0.0
  %v567 = vmax.f32 %v499, 0.0
  %v568 = vmax.f32 %v550, 0.0
  %v569 = vmax.f32 %v552, 0.0
  %v570 = vmax.f32 %v501, 0.0
  %v571 = vmax.f32 %v503, 0.0
  %v572 = vmax.f32 %v554, 0.0
  %v573 = vmax.f32 %v556, 0.0
  %v574 = vld [vmem:[%s3] sm:$0xff]
  %v576 = vcombine.high %v574, %v574
  %v578 = vunpack.c.l.s4 1983009808
  %v579 = vunpack.c.0.s8 %v578
  %v580 = vlaneseq
  %v581 = vshrl.u32 %v580, 7
  %v582 = vsub.s32 %v579, %v581
  %v583 = vrot.slane %v574, %v582
  %v585 = vunpack.c.l.s4 1983009808
  %v586 = vunpack.c.0.s8 %v585
  %v587 = vlaneseq
  %v588 = vshrl.u32 %v587, 7
  %v589 = vsub.s32 %v586, %v588
  %v590 = vrot.slane %v576, %v589
  %v591 = vcombine.high %v583, %v583
  %v592 = vcombine.high %v590, %v590
  %597 = vmatprep.subr.mxu0 %v559
  %598 = vmatpush1.xpose.msra.mxu0 %v558
  %599 = vmatprep.subr.mxu0 %v563
  %600 = vmatpush1.xpose.msra.mxu0 %v562
  %601 = vmatprep.subr.mxu0 %v567
  %602 = vmatpush1.xpose.msra.mxu0 %v566
  %603 = vmatprep.subr.mxu0 %v571
  %604 = vmatpush1.xpose.msra.mxu0 %v570
  %605 = vmatprep.subr.mxu0 0.0
  %606 = vmatpush1.xpose.msra.mxu0 0.0
  %607 = vmatprep.subr.mxu0 0.0
  %608 = vmatpush1.xpose.msra.mxu0 0.0
  %609 = vmatprep.subr.mxu0 0.0
  %610 = vmatpush1.xpose.msra.mxu0 0.0
  %611 = vmatprep.subr.mxu0 0.0
  %612 = vmatpush1.xpose.msra.mxu0 0.0
  %613 = vmatprep.subr.mxu0 0.0
  %614 = vmatpush1.xpose.msra.mxu0 0.0
  %615 = vmatprep.subr.mxu0 0.0
  %616 = vmatpush1.xpose.msra.mxu0 0.0
  %617 = vmatprep.subr.mxu0 0.0
  %618 = vmatpush1.xpose.msra.mxu0 0.0
  %619 = vmatprep.subr.mxu0 0.0
  %620 = vmatpush1.xpose.msra.mxu0 0.0
  %621 = vmatprep.subr.mxu0 0.0
  %622 = vmatpush1.xpose.msra.mxu0 0.0
  %623 = vmatprep.subr.mxu0 0.0
  %624 = vmatpush1.xpose.msra.mxu0 0.0
  %625 = vmatprep.subr.mxu0 0.0
  %626 = vmatpush1.xpose.msra.mxu0 0.0
  %627 = vmatprep.subr.mxu0 0.0
  %628 = vmatpush1.xpose.msra.mxu0 0.0
  %629 = vmatprep.subr.mxu0 0.0
  %630 = vmatpush1.xpose.msra.mxu0 0.0
  %631 = vmatprep.subr.mxu0 0.0
  %632 = vmatpush1.xpose.msra.mxu0 0.0
  %633 = vmatprep.subr.mxu0 0.0
  %634 = vmatpush1.xpose.msra.mxu0 0.0
  %635 = vmatprep.subr.mxu0 0.0
  %636 = vmatpush1.xpose.msra.mxu0 0.0
  %637 = vmatprep.subr.mxu0 0.0
  %638 = vmatpush1.xpose.msra.mxu0 0.0
  %639 = vmatprep.subr.mxu0 0.0
  %640 = vmatpush1.xpose.msra.mxu0 0.0
  %641 = vmatprep.subr.mxu0 0.0
  %642 = vmatpush1.xpose.msra.mxu0 0.0
  %643 = vmatprep.subr.mxu0 0.0
  %644 = vmatpush1.xpose.msra.mxu0 0.0
  %645 = vmatprep.subr.mxu0 0.0
  %646 = vmatpush1.xpose.msra.mxu0 0.0
  %647 = vmatprep.subr.mxu0 0.0
  %648 = vmatpush1.xpose.msra.mxu0 0.0
  %649 = vmatprep.subr.mxu0 0.0
  %650 = vmatpush1.xpose.msra.mxu0 0.0
  %651 = vmatprep.subr.mxu0 0.0
  %652 = vmatpush1.xpose.msra.mxu0 0.0
  %653 = vmatprep.subr.mxu0 0.0
  %654 = vmatpush1.xpose.msra.mxu0 0.0
  %655 = vmatprep.subr.mxu0 0.0
  %656 = vmatpush1.xpose.msra.mxu0 0.0
  %657 = vmatprep.subr.mxu0 0.0
  %658 = vmatpush1.xpose.msra.mxu0 0.0
  %659 = vmatprep.subr.mxu0 0.0
  %660 = vmatpush1.xpose.msra.mxu0 0.0
  %661 = vmatprep.mubr.f32.mxu0 %v591
  %662 = vmatmul.mubr.f32.gmra.mrb[0].mxu0 %v583
  %v663 = vpop.f32.mrb[0].mxu0
  %v664 = vadd.f32 0.0, %v663
  %v665 = vpop.f32.mrb[0].mxu0
  %666 = vdwg.mxu0
  %667 = vmatprep.subr.mxu0 %v561
  %668 = vmatpush1.xpose.msra.mxu0 %v560
  %669 = vmatprep.subr.mxu0 %v565
  %670 = vmatpush1.xpose.msra.mxu0 %v564
  %671 = vmatprep.subr.mxu0 %v569
  %672 = vmatpush1.xpose.msra.mxu0 %v568
  %673 = vmatprep.subr.mxu0 %v573
  %674 = vmatpush1.xpose.msra.mxu0 %v572
  %675 = vmatprep.subr.mxu0 0.0
  %676 = vmatpush1.xpose.msra.mxu0 0.0
  %677 = vmatprep.subr.mxu0 0.0
  %678 = vmatpush1.xpose.msra.mxu0 0.0
  %679 = vmatprep.subr.mxu0 0.0
  %680 = vmatpush1.xpose.msra.mxu0 0.0
  %681 = vmatprep.subr.mxu0 0.0
  %682 = vmatpush1.xpose.msra.mxu0 0.0
  %683 = vmatprep.subr.mxu0 0.0
  %684 = vmatpush1.xpose.msra.mxu0 0.0
  %685 = vmatprep.subr.mxu0 0.0
  %686 = vmatpush1.xpose.msra.mxu0 0.0
  %687 = vmatprep.subr.mxu0 0.0
  %688 = vmatpush1.xpose.msra.mxu0 0.0
  %689 = vmatprep.subr.mxu0 0.0
  %690 = vmatpush1.xpose.msra.mxu0 0.0
  %691 = vmatprep.subr.mxu0 0.0
  %692 = vmatpush1.xpose.msra.mxu0 0.0
  %693 = vmatprep.subr.mxu0 0.0
  %694 = vmatpush1.xpose.msra.mxu0 0.0
  %695 = vmatprep.subr.mxu0 0.0
  %696 = vmatpush1.xpose.msra.mxu0 0.0
  %697 = vmatprep.subr.mxu0 0.0
  %698 = vmatpush1.xpose.msra.mxu0 0.0
  %699 = vmatprep.subr.mxu0 0.0
  %700 = vmatpush1.xpose.msra.mxu0 0.0
  %701 = vmatprep.subr.mxu0 0.0
  %702 = vmatpush1.xpose.msra.mxu0 0.0
  %703 = vmatprep.subr.mxu0 0.0
  %704 = vmatpush1.xpose.msra.mxu0 0.0
  %705 = vmatprep.subr.mxu0 0.0
  %706 = vmatpush1.xpose.msra.mxu0 0.0
  %707 = vmatprep.subr.mxu0 0.0
  %708 = vmatpush1.xpose.msra.mxu0 0.0
  %709 = vmatprep.subr.mxu0 0.0
  %710 = vmatpush1.xpose.msra.mxu0 0.0
  %711 = vmatprep.subr.mxu0 0.0
  %712 = vmatpush1.xpose.msra.mxu0 0.0
  %713 = vmatprep.subr.mxu0 0.0
  %714 = vmatpush1.xpose.msra.mxu0 0.0
  %715 = vmatprep.subr.mxu0 0.0
  %716 = vmatpush1.xpose.msra.mxu0 0.0
  %717 = vmatprep.subr.mxu0 0.0
  %718 = vmatpush1.xpose.msra.mxu0 0.0
  %719 = vmatprep.subr.mxu0 0.0
  %720 = vmatpush1.xpose.msra.mxu0 0.0
  %721 = vmatprep.subr.mxu0 0.0
  %722 = vmatpush1.xpose.msra.mxu0 0.0
  %723 = vmatprep.subr.mxu0 0.0
  %724 = vmatpush1.xpose.msra.mxu0 0.0
  %725 = vmatprep.subr.mxu0 0.0
  %726 = vmatpush1.xpose.msra.mxu0 0.0
  %727 = vmatprep.subr.mxu0 0.0
  %728 = vmatpush1.xpose.msra.mxu0 0.0
  %729 = vmatprep.subr.mxu0 0.0
  %730 = vmatpush1.xpose.msra.mxu0 0.0
  %731 = vmatprep.mubr.f32.mxu0 %v592
  %732 = vmatmul.mubr.f32.gmra.mrb[0].mxu0 %v590
  %v733 = vpop.f32.mrb[0].mxu0
  %v734 = vadd.f32 %v664, %v733
  %v735 = vpop.f32.mrb[0].mxu0
  %736 = vdwg.mxu0
  %v737 = vld [vmem:[%s4] sm:$0xff]
  %v738 = vld [vmem:[%s4 + $0x8] sm:$0xff]
  %v739 = vld [vmem:[%s4 + $0x10] sm:$0xff]
  %v740 = vld [vmem:[%s4 + $0x18] sm:$0xff]
  %v741 = vld [vmem:[%s5] sm:$0x1]
  %v743 = vlaneseq
  %v744 = vshrl.u32 %v743, 7
  %v745 = vsub.s32 0, %v744
  %v746 = vrot.slane %v741, %v745
  %vm748 = vcmask 261120
  %v750 = vsel %vm748, %v734, 0
  %752 = vmatprep.subr.mxu0 0.0
  %753 = vmatpush1.msra.mxu0 %v737
  %754 = vmatprep.subr.mxu0 0.0
  %755 = vmatpush1.msra.mxu0 %v738
  %756 = vmatprep.subr.mxu0 0.0
  %757 = vmatpush1.msra.mxu0 %v739
  %758 = vmatprep.subr.mxu0 0.0
  %759 = vmatpush1.msra.mxu0 %v740
  %760 = vmatprep.subr.mxu0 0.0
  %761 = vmatpush1.msra.mxu0 0.0
  %762 = vmatprep.subr.mxu0 0.0
  %763 = vmatpush1.msra.mxu0 0.0
  %764 = vmatprep.subr.mxu0 0.0
  %765 = vmatpush1.msra.mxu0 0.0
  %766 = vmatprep.subr.mxu0 0.0
  %767 = vmatpush1.msra.mxu0 0.0
  %768 = vmatprep.subr.mxu0 0.0
  %769 = vmatpush1.msra.mxu0 0.0
  %770 = vmatprep.subr.mxu0 0.0
  %771 = vmatpush1.msra.mxu0 0.0
  %772 = vmatprep.subr.mxu0 0.0
  %773 = vmatpush1.msra.mxu0 0.0
  %774 = vmatprep.subr.mxu0 0.0
  %775 = vmatpush1.msra.mxu0 0.0
  %776 = vmatprep.subr.mxu0 0.0
  %777 = vmatpush1.msra.mxu0 0.0
  %778 = vmatprep.subr.mxu0 0.0
  %779 = vmatpush1.msra.mxu0 0.0
  %780 = vmatprep.subr.mxu0 0.0
  %781 = vmatpush1.msra.mxu0 0.0
  %782 = vmatprep.subr.mxu0 0.0
  %783 = vmatpush1.msra.mxu0 0.0
  %784 = vmatprep.subr.mxu0 0.0
  %785 = vmatpush1.msra.mxu0 0.0
  %786 = vmatprep.subr.mxu0 0.0
  %787 = vmatpush1.msra.mxu0 0.0
  %788 = vmatprep.subr.mxu0 0.0
  %789 = vmatpush1.msra.mxu0 0.0
  %790 = vmatprep.subr.mxu0 0.0
  %791 = vmatpush1.msra.mxu0 0.0
  %792 = vmatprep.subr.mxu0 0.0
  %793 = vmatpush1.msra.mxu0 0.0
  %794 = vmatprep.subr.mxu0 0.0
  %795 = vmatpush1.msra.mxu0 0.0
  %796 = vmatprep.subr.mxu0 0.0
  %797 = vmatpush1.msra.mxu0 0.0
  %798 = vmatprep.subr.mxu0 0.0
  %799 = vmatpush1.msra.mxu0 0.0
  %800 = vmatprep.subr.mxu0 0.0
  %801 = vmatpush1.msra.mxu0 0.0
  %802 = vmatprep.subr.mxu0 0.0
  %803 = vmatpush1.msra.mxu0 0.0
  %804 = vmatprep.subr.mxu0 0.0
  %805 = vmatpush1.msra.mxu0 0.0
  %806 = vmatprep.subr.mxu0 0.0
  %807 = vmatpush1.msra.mxu0 0.0
  %808 = vmatprep.subr.mxu0 0.0
  %809 = vmatpush1.msra.mxu0 0.0
  %810 = vmatprep.subr.mxu0 0.0
  %811 = vmatpush1.msra.mxu0 0.0
  %812 = vmatprep.subr.mxu0 0.0
  %813 = vmatpush1.msra.mxu0 0.0
  %814 = vmatprep.subr.mxu0 0.0
  %815 = vmatpush1.msra.mxu0 0.0
  %816 = vmatprep.mubr.f32.mxu0 0.0
  %817 = vmatmul.mubr.f32.gmra.mrb[0].mxu0 %v750
  %v818 = vpop.f32.mrb[0].mxu0
  %v819 = vadd.f32 %v746, %v818
  %v820 = vpop.f32.mrb[0].mxu0
  %821 = vdwg.mxu0
  %v822 = vld [vmem:[%s6] sm:$0xff]
  %v823 = vld [vmem:[%s6 + $0x8] sm:$0xff]
  %v824 = vld [vmem:[%s6 + $0x10] sm:$0xff]
  %v825 = vld [vmem:[%s6 + $0x18] sm:$0xff]
  %v826 = vld [vmem:[%s7] sm:$0x1]
  %v828 = vlaneseq
  %v829 = vshrl.u32 %v828, 7
  %v830 = vsub.s32 0, %v829
  %v831 = vrot.slane %v826, %v830
  %833 = vmatprep.subr.mxu0 0.0
  %834 = vmatpush1.msra.mxu0 %v822
  %835 = vmatprep.subr.mxu0 0.0
  %836 = vmatpush1.msra.mxu0 %v823
  %837 = vmatprep.subr.mxu0 0.0
  %838 = vmatpush1.msra.mxu0 %v824
  %839 = vmatprep.subr.mxu0 0.0
  %840 = vmatpush1.msra.mxu0 %v825
  %841 = vmatprep.subr.mxu0 0.0
  %842 = vmatpush1.msra.mxu0 0.0
  %843 = vmatprep.subr.mxu0 0.0
  %844 = vmatpush1.msra.mxu0 0.0
  %845 = vmatprep.subr.mxu0 0.0
  %846 = vmatpush1.msra.mxu0 0.0
  %847 = vmatprep.subr.mxu0 0.0
  %848 = vmatpush1.msra.mxu0 0.0
  %849 = vmatprep.subr.mxu0 0.0
  %850 = vmatpush1.msra.mxu0 0.0
  %851 = vmatprep.subr.mxu0 0.0
  %852 = vmatpush1.msra.mxu0 0.0
  %853 = vmatprep.subr.mxu0 0.0
  %854 = vmatpush1.msra.mxu0 0.0
  %855 = vmatprep.subr.mxu0 0.0
  %856 = vmatpush1.msra.mxu0 0.0
  %857 = vmatprep.subr.mxu0 0.0
  %858 = vmatpush1.msra.mxu0 0.0
  %859 = vmatprep.subr.mxu0 0.0
  %860 = vmatpush1.msra.mxu0 0.0
  %861 = vmatprep.subr.mxu0 0.0
  %862 = vmatpush1.msra.mxu0 0.0
  %863 = vmatprep.subr.mxu0 0.0
  %864 = vmatpush1.msra.mxu0 0.0
  %865 = vmatprep.subr.mxu0 0.0
  %866 = vmatpush1.msra.mxu0 0.0
  %867 = vmatprep.subr.mxu0 0.0
  %868 = vmatpush1.msra.mxu0 0.0
  %869 = vmatprep.subr.mxu0 0.0
  %870 = vmatpush1.msra.mxu0 0.0
  %871 = vmatprep.subr.mxu0 0.0
  %872 = vmatpush1.msra.mxu0 0.0
  %873 = vmatprep.subr.mxu0 0.0
  %874 = vmatpush1.msra.mxu0 0.0
  %875 = vmatprep.subr.mxu0 0.0
  %876 = vmatpush1.msra.mxu0 0.0
  %877 = vmatprep.subr.mxu0 0.0
  %878 = vmatpush1.msra.mxu0 0.0
  %879 = vmatprep.subr.mxu0 0.0
  %880 = vmatpush1.msra.mxu0 0.0
  %881 = vmatprep.subr.mxu0 0.0
  %882 = vmatpush1.msra.mxu0 0.0
  %883 = vmatprep.subr.mxu0 0.0
  %884 = vmatpush1.msra.mxu0 0.0
  %885 = vmatprep.subr.mxu0 0.0
  %886 = vmatpush1.msra.mxu0 0.0
  %887 = vmatprep.subr.mxu0 0.0
  %888 = vmatpush1.msra.mxu0 0.0
  %889 = vmatprep.subr.mxu0 0.0
  %890 = vmatpush1.msra.mxu0 0.0
  %891 = vmatprep.subr.mxu0 0.0
  %892 = vmatpush1.msra.mxu0 0.0
  %893 = vmatprep.subr.mxu0 0.0
  %894 = vmatpush1.msra.mxu0 0.0
  %895 = vmatprep.subr.mxu0 0.0
  %896 = vmatpush1.msra.mxu0 0.0
  %897 = vmatprep.mubr.f32.mxu0 0.0
  %898 = vmatmul.mubr.f32.gmra.mrb[0].mxu0 %v750
  %v899 = vpop.f32.mrb[0].mxu0
  %v900 = vadd.f32 %v831, %v899
  %v901 = vpop.f32.mrb[0].mxu0
  %902 = vdwg.mxu0
  %v903 = vxor.u32 %v900, 2147483648
  %v904 = vmul.f32 %v903, 1.442695
  %v905 = vpow.pop %v904
  %v906 = vadd.f32 %v905, 1.0
  %v907 = vrcp.pop %v906
  %v908 = vmul.f32 1.0, %v907
  %vm909 = vcmask 123904
  %910 = vst.msk [vmem:[%s12] sm:$0x3] %vm909, %v819
  %vm911 = vcmask 9216
  %912 = vst.msk [vmem:[%s13] sm:$0x3] %vm911, %v908
  %v913 = vld [vmem:[%s8] sm:$0xff]
  %v914 = vld [vmem:[%s8 + $0x8] sm:$0xff]
  %v915 = vld [vmem:[%s9] sm:$0x1]
  %v917 = vlaneseq
  %v918 = vshrl.u32 %v917, 7
  %v919 = vsub.s32 0, %v918
  %v920 = vrot.slane %v915, %v919
  %v923 = vsel %vm445, %v819, 0
  %925 = vmatprep.subr.mxu0 0.0
  %926 = vmatpush1.msra.mxu0 %v913
  %927 = vmatprep.subr.mxu0 0.0
  %928 = vmatpush1.msra.mxu0 %v914
  %929 = vmatprep.subr.mxu0 0.0
  %930 = vmatpush1.msra.mxu0 0.0
  %931 = vmatprep.subr.mxu0 0.0
  %932 = vmatpush1.msra.mxu0 0.0
  %933 = vmatprep.subr.mxu0 0.0
  %934 = vmatpush1.msra.mxu0 0.0
  %935 = vmatprep.subr.mxu0 0.0
  %936 = vmatpush1.msra.mxu0 0.0
  %937 = vmatprep.subr.mxu0 0.0
  %938 = vmatpush1.msra.mxu0 0.0
  %939 = vmatprep.subr.mxu0 0.0
  %940 = vmatpush1.msra.mxu0 0.0
  %941 = vmatprep.subr.mxu0 0.0
  %942 = vmatpush1.msra.mxu0 0.0
  %943 = vmatprep.subr.mxu0 0.0
  %944 = vmatpush1.msra.mxu0 0.0
  %945 = vmatprep.subr.mxu0 0.0
  %946 = vmatpush1.msra.mxu0 0.0
  %947 = vmatprep.subr.mxu0 0.0
  %948 = vmatpush1.msra.mxu0 0.0
  %949 = vmatprep.subr.mxu0 0.0
  %950 = vmatpush1.msra.mxu0 0.0
  %951 = vmatprep.subr.mxu0 0.0
  %952 = vmatpush1.msra.mxu0 0.0
  %953 = vmatprep.subr.mxu0 0.0
  %954 = vmatpush1.msra.mxu0 0.0
  %955 = vmatprep.subr.mxu0 0.0
  %956 = vmatpush1.msra.mxu0 0.0
  %957 = vmatprep.subr.mxu0 0.0
  %958 = vmatpush1.msra.mxu0 0.0
  %959 = vmatprep.subr.mxu0 0.0
  %960 = vmatpush1.msra.mxu0 0.0
  %961 = vmatprep.subr.mxu0 0.0
  %962 = vmatpush1.msra.mxu0 0.0
  %963 = vmatprep.subr.mxu0 0.0
  %964 = vmatpush1.msra.mxu0 0.0
  %965 = vmatprep.subr.mxu0 0.0
  %966 = vmatpush1.msra.mxu0 0.0
  %967 = vmatprep.subr.mxu0 0.0
  %968 = vmatpush1.msra.mxu0 0.0
  %969 = vmatprep.subr.mxu0 0.0
  %970 = vmatpush1.msra.mxu0 0.0
  %971 = vmatprep.subr.mxu0 0.0
  %972 = vmatpush1.msra.mxu0 0.0
  %973 = vmatprep.subr.mxu0 0.0
  %974 = vmatpush1.msra.mxu0 0.0
  %975 = vmatprep.subr.mxu0 0.0
  %976 = vmatpush1.msra.mxu0 0.0
  %977 = vmatprep.subr.mxu0 0.0
  %978 = vmatpush1.msra.mxu0 0.0
  %979 = vmatprep.subr.mxu0 0.0
  %980 = vmatpush1.msra.mxu0 0.0
  %981 = vmatprep.subr.mxu0 0.0
  %982 = vmatpush1.msra.mxu0 0.0
  %983 = vmatprep.subr.mxu0 0.0
  %984 = vmatpush1.msra.mxu0 0.0
  %985 = vmatprep.subr.mxu0 0.0
  %986 = vmatpush1.msra.mxu0 0.0
  %987 = vmatprep.subr.mxu0 0.0
  %988 = vmatpush1.msra.mxu0 0.0
  %989 = vmatprep.mubr.f32.mxu0 0.0
  %990 = vmatmul.mubr.f32.gmra.mrb[0].mxu0 %v923
  %v991 = vpop.f32.mrb[0].mxu0
  %v992 = vadd.f32 %v920, %v991
  %v993 = vpop.f32.mrb[0].mxu0
  %994 = vdwg.mxu0
  %v995 = vmax.f32 %v992, 0.0
  %v996 = vld [vmem:[%s10] sm:$0xff]
  %v997 = vld [vmem:[%s10 + $0x8] sm:$0xff]
  %v998 = vld [vmem:[%s10 + $0x10] sm:$0xff]
  %v999 = vld [vmem:[%s10 + $0x18] sm:$0xff]
  %v1000 = vld [vmem:[#allocation2] sm:$0x1]
  %v1002 = vlaneseq
  %v1003 = vshrl.u32 %v1002, 7
  %v1004 = vsub.s32 0, %v1003
  %v1005 = vrot.slane %v1000, %v1004
  %v1008 = vsel %vm748, %v995, 0
  %1010 = vmatprep.subr.mxu0 0.0
  %1011 = vmatpush1.msra.mxu0 %v996
  %1012 = vmatprep.subr.mxu0 0.0
  %1013 = vmatpush1.msra.mxu0 %v997
  %1014 = vmatprep.subr.mxu0 0.0
  %1015 = vmatpush1.msra.mxu0 %v998
  %1016 = vmatprep.subr.mxu0 0.0
  %1017 = vmatpush1.msra.mxu0 %v999
  %1018 = vmatprep.subr.mxu0 0.0
  %1019 = vmatpush1.msra.mxu0 0.0
  %1020 = vmatprep.subr.mxu0 0.0
  %1021 = vmatpush1.msra.mxu0 0.0
  %1022 = vmatprep.subr.mxu0 0.0
  %1023 = vmatpush1.msra.mxu0 0.0
  %1024 = vmatprep.subr.mxu0 0.0
  %1025 = vmatpush1.msra.mxu0 0.0
  %1026 = vmatprep.subr.mxu0 0.0
  %1027 = vmatpush1.msra.mxu0 0.0
  %1028 = vmatprep.subr.mxu0 0.0
  %1029 = vmatpush1.msra.mxu0 0.0
  %1030 = vmatprep.subr.mxu0 0.0
  %1031 = vmatpush1.msra.mxu0 0.0
  %1032 = vmatprep.subr.mxu0 0.0
  %1033 = vmatpush1.msra.mxu0 0.0
  %1034 = vmatprep.subr.mxu0 0.0
  %1035 = vmatpush1.msra.mxu0 0.0
  %1036 = vmatprep.subr.mxu0 0.0
  %1037 = vmatpush1.msra.mxu0 0.0
  %1038 = vmatprep.subr.mxu0 0.0
  %1039 = vmatpush1.msra.mxu0 0.0
  %1040 = vmatprep.subr.mxu0 0.0
  %1041 = vmatpush1.msra.mxu0 0.0
  %1042 = vmatprep.subr.mxu0 0.0
  %1043 = vmatpush1.msra.mxu0 0.0
  %1044 = vmatprep.subr.mxu0 0.0
  %1045 = vmatpush1.msra.mxu0 0.0
  %1046 = vmatprep.subr.mxu0 0.0
  %1047 = vmatpush1.msra.mxu0 0.0
  %1048 = vmatprep.subr.mxu0 0.0
  %1049 = vmatpush1.msra.mxu0 0.0
  %1050 = vmatprep.subr.mxu0 0.0
  %1051 = vmatpush1.msra.mxu0 0.0
  %1052 = vmatprep.subr.mxu0 0.0
  %1053 = vmatpush1.msra.mxu0 0.0
  %1054 = vmatprep.subr.mxu0 0.0
  %1055 = vmatpush1.msra.mxu0 0.0
  %1056 = vmatprep.subr.mxu0 0.0
  %1057 = vmatpush1.msra.mxu0 0.0
  %1058 = vmatprep.subr.mxu0 0.0
  %1059 = vmatpush1.msra.mxu0 0.0
  %1060 = vmatprep.subr.mxu0 0.0
  %1061 = vmatpush1.msra.mxu0 0.0
  %1062 = vmatprep.subr.mxu0 0.0
  %1063 = vmatpush1.msra.mxu0 0.0
  %1064 = vmatprep.subr.mxu0 0.0
  %1065 = vmatpush1.msra.mxu0 0.0
  %1066 = vmatprep.subr.mxu0 0.0
  %1067 = vmatpush1.msra.mxu0 0.0
  %1068 = vmatprep.subr.mxu0 0.0
  %1069 = vmatpush1.msra.mxu0 0.0
  %1070 = vmatprep.subr.mxu0 0.0
  %1071 = vmatpush1.msra.mxu0 0.0
  %1072 = vmatprep.subr.mxu0 0.0
  %1073 = vmatpush1.msra.mxu0 0.0
  %1074 = vmatprep.mubr.f32.mxu0 0.0
  %1075 = vmatmul.mubr.f32.gmra.mrb[0].mxu0 %v1008
  %v1076 = vpop.f32.mrb[0].mxu0
  %v1077 = vadd.f32 %v1005, %v1076
  %v1078 = vpop.f32.mrb[0].mxu0
  %1079 = vdwg.mxu0
  %v1080 = vxor.u32 %v1077, 2147483648
  %v1081 = vmul.f32 %v1080, 1.442695
  %v1082 = vpow.pop %v1081
  %v1083 = vadd.f32 %v1082, 1.0
  %v1084 = vrcp.pop %v1083
  %v1085 = vmul.f32 1.0, %v1084
  %vm1086 = vcmask 1024
  %1087 = vst.msk [vmem:[%s14] sm:$0x3] %vm1086, %v1085
  // Predicated region
  $region50: #{combined_model_forward.1} parent=0 // pred_check
    _
  $region51: #{combined_model_forward.1} parent=0 // pred_check_branch
    %1089 = sbr.rel (0) target = $region53
  $region52: #{combined_model_forward.1} parent=0 // pred_region
    _
  $region53: #{combined_model_forward.1} parent=0 // pred_fallthru
    _
  // Predicated region
  $region54: #{combined_model_forward.1} parent=0 // pred_check
    _
  $region55: #{combined_model_forward.1} parent=0 // pred_check_branch
    %1091 = sbr.rel (0) target = $region57
  $region56: #{combined_model_forward.1} parent=0 // pred_region
    _
  $region57: #{combined_model_forward.1} parent=0 // pred_fallthru
    _
  // Predicated region
  $region58: #{combined_model_forward.1} parent=0 // pred_check
    _
  $region59: #{combined_model_forward.1} parent=0 // pred_check_branch
    %1093 = sbr.rel (0) target = $region61
  $region60: #{combined_model_forward.1} parent=0 // pred_region
    _
  $region61: #{combined_model_forward.1} parent=0 // pred_fallthru
    _
  // Predicated region
  $region62: #{combined_model_forward.1} parent=0 // pred_check
    _
  $region63: #{combined_model_forward.1} parent=0 // pred_check_branch
    %1095 = sbr.rel (0) target = $region65
  $region64: #{combined_model_forward.1} parent=0 // pred_region
    _
  $region65: #{combined_model_forward.1} parent=0 // pred_fallthru
    _
  // Predicated region
  $region66: #{combined_model_forward.1} parent=0 // pred_check
    _
  $region67: #{combined_model_forward.1} parent=0 // pred_check_branch
    %1097 = sbr.rel (0) target = $region69
  $region68: #{combined_model_forward.1} parent=0 // pred_region
    _
  $region69: #{combined_model_forward.1} parent=0 // pred_fallthru
    _
  // Predicated region
  $region70: #{combined_model_forward.1} parent=0 // pred_check
    _
  $region71: #{combined_model_forward.1} parent=0 // pred_check_branch
    %1099 = sbr.rel (0) target = $region73
  $region72: #{combined_model_forward.1} parent=0 // pred_region
    _
  $region73: #{combined_model_forward.1} parent=0 // pred_fallthru
    _

</llo_original>
